<compile_context>
chip_gen: v6e
topology: v6e:2x2x1
jax: 0.10.0
libtpu: 0.0.40
codegen_flags: <defaults>
</compile_context>

<pallas_src>
import functools

import jax
import jax.numpy as jnp
from jax.experimental import pallas as pl
from jax.experimental.pallas import tpu as pltpu


def _residual_kernel(x_ref, params_ref, out_ref, xpad_ref, *, H, W, C, KH, KW, RS):
    """One grid step = one (image, channel-block) pair.

    x_ref      : (H, W, C)            input block (also the residual source); C = Ctile
    params_ref : (KH*KW + 3, C)       rows 0..KH*KW-1 per-tap depthwise weights, then
                                      conv bias, BN scale, BN shift (per-channel, f32)
    out_ref    : (H, W, C)
    xpad_ref   : (H+KH-1, W+KW-1, C)  f32 VMEM scratch: zero-padded image
    """
    NT = KH * KW
    ph, pw = KH // 2, KW // 2
    Hp, Wp = H + KH - 1, W + KW - 1

    # ---- zero ONLY the pad borders; the interior is fully overwritten below ----
    if ph:
        xpad_ref[0:ph, :, :] = jnp.zeros((ph, Wp, C), jnp.float32)
        xpad_ref[ph + H:Hp, :, :] = jnp.zeros((Hp - ph - H, Wp, C), jnp.float32)
    if pw:
        xpad_ref[ph:ph + H, 0:pw, :] = jnp.zeros((H, pw, C), jnp.float32)
        xpad_ref[ph:ph + H, pw + W:Wp, :] = jnp.zeros((H, Wp - pw - W, C), jnp.float32)

    # ---- copy the (f32-cast) image into the padded scratch (single pass) ----
    xpad_ref[ph:ph + H, pw:pw + W, :] = x_ref[...].astype(jnp.float32)

    # ---- per-channel params; (1,1,C) rows broadcast over (RS, W, C) tiles (hoisted) ----
    w_taps = [params_ref[t:t + 1, :].reshape(1, 1, C) for t in range(NT)]
    bias = params_ref[NT:NT + 1, :].reshape(1, 1, C)
    scale = params_ref[NT + 1:NT + 2, :].reshape(1, 1, C)
    shift = params_ref[NT + 2:NT + 3, :].reshape(1, 1, C)

    # ---- depthwise conv + GELU + BN + residual, over RS-row strips (vreg-resident acc) ----
    @pl.loop(0, H // RS)
    def _(s):
        r0 = pl.multiple_of(s * RS, RS)

        acc = None
        for kw in range(KW):
            # one sublane-shifted slab load per kw; the KH row taps below are cheap
            # leading-dim slices of this value.
            slab = xpad_ref[pl.ds(r0, RS + KH - 1), kw:kw + W, :]     # (RS+KH-1, W, C)
            for kh in range(KH):
                term = slab[kh:kh + RS] * w_taps[kh * KW + kw]         # (RS, W, C)
                acc = term if acc is None else acc + term
        acc = acc + bias

        # GELU (tanh approximation); tanh goes to the EUP slot.
        acc2 = acc * acc
        inner = 0.7978845608028654 * acc * (1.0 + 0.044715 * acc2)     # sqrt(2/pi)
        y = 0.5 * acc * (1.0 + jnp.tanh(inner))

        # folded BatchNorm2d (inference) + residual add (the Residual module itself)
        y = y * scale + shift
        xres = x_ref[pl.ds(r0, RS), :, :].astype(jnp.float32)
        out_ref[pl.ds(r0, RS), :, :] = (y + xres).astype(out_ref.dtype)


def pack_convmixer_params(w_hwC, b, gamma, beta, mean, var, eps=1e-5):
    """Fold BatchNorm into scale/shift and pack everything into one (KH*KW+3, C) f32 array.

    Call ONCE at model init (not per forward call)."""
    KH, KW, C = w_hwC.shape
    scale = gamma * jax.lax.rsqrt(var + eps)
    shift = beta - mean * scale
    return jnp.concatenate(
        [w_hwC.reshape(KH * KW, C), b[None, :], scale[None, :], shift[None, :]],
        axis=0).astype(jnp.float32)


def _choose_ctile(C):
    # Lane-aligned channel tile. 256 is the v7x-friendly default; pass ctile=512 on
    # v5e/v6e (128 MiB VMEM) to amortize per-step overhead with longer DMAs.
    for ct in (256, 512, 384, 128):
        if C % ct == 0:
            return ct
    return C  # C not a multiple of 128: single (masked-lane) block -- correct, just slower


def residual_convmixer_block_nhwc(x_nhwc, params, kernel_size, *, ctile=None):
    """NHWC fast path: no wrapper-side layout passes at all.  x_nhwc: (N, H, W, C)."""
    N, H, W, C = x_nhwc.shape
    KH, KW = (kernel_size, kernel_size) if isinstance(kernel_size, int) else kernel_size
    assert KH % 2 == 1 and KW % 2 == 1, "padding='same' path assumes odd kernel sizes"
    NT = KH * KW
    assert params.shape == (NT + 3, C)

    Ctile = _choose_ctile(C) if ctile is None else ctile
    assert C % Ctile == 0
    Hp, Wp = H + KH - 1, W + KW - 1

    # Row-strip height: keeps the conv accumulator (RS, W, Ctile) close to the vreg file.
    RS = next(r for r in (8, 4, 2, 1) if H % r == 0)

    kernel = functools.partial(_residual_kernel, H=H, W=W, C=Ctile, KH=KH, KW=KW, RS=RS)

    # Explicit VMEM budget: double-buffered in/out/params blocks + pad scratch + headroom.
    itemsize = jnp.dtype(x_nhwc.dtype).itemsize
    vmem_need = (2 * 2 * H * W * Ctile * itemsize          # x + out, double-buffered
                 + 2 * (NT + 3) * Ctile * 4                # params, double-buffered
                 + Hp * Wp * Ctile * 4)                    # pad scratch
    vmem_limit = int(min(max(2 * vmem_need + (4 << 20), 32 << 20), 64 << 20))

    out = pl.pallas_call(
        kernel,
        out_shape=jax.ShapeDtypeStruct((N, H, W, C), x_nhwc.dtype),
        grid_spec=pltpu.PrefetchScalarGridSpec(
            num_scalar_prefetch=0,
            grid=(N, C // Ctile),
            in_specs=[
                pl.BlockSpec((None, H, W, Ctile), lambda n, c: (n, 0, 0, c)),
                pl.BlockSpec((NT + 3, Ctile), lambda n, c: (0, c)),
            ],
            out_specs=pl.BlockSpec((None, H, W, Ctile), lambda n, c: (n, 0, 0, c)),
            scratch_shapes=[pltpu.VMEM((Hp, Wp, Ctile), jnp.float32)],
        ),
        compiler_params=pltpu.CompilerParams(
            dimension_semantics=("parallel", "parallel"),
            vmem_limit_bytes=vmem_limit),
    )(x_nhwc, params)
    return out


def residual_convmixer_block(x_nchw, params, kernel_size, *, ctile=None):
    """PyTorch-layout wrapper: (N, C, H, W) in / out.

    The two transposes below are full HBM read+write passes; prefer
    residual_convmixer_block_nhwc if the model runs NHWC end-to-end."""
    out_nhwc = residual_convmixer_block_nhwc(
        jnp.transpose(x_nchw, (0, 2, 3, 1)), params, kernel_size, ctile=ctile)
    return jnp.transpose(out_nhwc, (0, 3, 1, 2))


def _reference(x_nchw, w_hwC, b, gamma, beta, mean, var, eps=1e-5):
    """Pure-JAX reference (same tanh-GELU) for a sanity check."""
    x = jnp.transpose(x_nchw, (0, 2, 3, 1))
    C = x.shape[-1]
    w = w_hwC[:, :, None, :]                               # (KH, KW, 1, C) HWIO, depthwise
    y = jax.lax.conv_general_dilated(
        x, w, window_strides=(1, 1), padding="SAME",
        dimension_numbers=("NHWC", "HWIO", "NHWC"),
        feature_group_count=C) + b
    c0, c1 = 0.7978845608028654, 0.044715
    y = 0.5 * y * (1.0 + jnp.tanh(c0 * (y + c1 * y ** 3)))
    y = (y - mean) * jax.lax.rsqrt(var + eps) * gamma + beta
    return jnp.transpose(y + x, (0, 3, 1, 2))


if __name__ == "__main__":
    key = jax.random.PRNGKey(0)
    N, C, H, W = 2, 256, 16, 16
    K = 3

    k0, k1, k2, k3, k4, k5, k6 = jax.random.split(key, 7)
    x = jax.random.normal(k0, (N, C, H, W), jnp.float32)
    w = jax.random.normal(k1, (K, K, C), jnp.float32) * 0.1      # depthwise weights
    b = jax.random.normal(k2, (C,), jnp.float32) * 0.1
    gamma = 1.0 + 0.1 * jax.random.normal(k3, (C,), jnp.float32)
    beta = 0.1 * jax.random.normal(k4, (C,), jnp.float32)
    mean = 0.1 * jax.random.normal(k5, (C,), jnp.float32)
    var = jnp.abs(jax.random.normal(k6, (C,), jnp.float32)) + 0.5

    params = pack_convmixer_params(w, b, gamma, beta, mean, var)  # once, at "model init"

    # ctile=128 -> grid = (N, C//128) = (2, 2): exercises the channel-block axis.
    out = residual_convmixer_block(x, params, K, ctile=128)
    out = jax.block_until_ready(out)

    ref = _reference(x, w, b, gamma, beta, mean, var)
    assert out.shape == (N, C, H, W)
    assert jnp.allclose(out, ref, atol=1e-4, rtol=1e-4), float(jnp.max(jnp.abs(out - ref)))

    print("KERNEL_OK")
</pallas_src>

<mosaic_0001>
module attributes {stable_mosaic.version = 11 : i64} {
  func.func @_residual_kernel(%arg0: i32, %arg1: i32, %arg2: memref<1x16x16x128xf32, #tpu.memory_space<vmem>>, %arg3: memref<12x128xf32, #tpu.memory_space<vmem>>, %arg4: memref<1x16x16x128xf32, #tpu.memory_space<vmem>>, %arg5: memref<18x18x128xf32, #tpu.memory_space<vmem>>) attributes {dimension_semantics = [#tpu.dimension_semantics<parallel>, #tpu.dimension_semantics<parallel>], iteration_bounds = array<i64: 2, 2>, scalar_prefetch = 0 : i64, scratch_operands = 1 : i64, tpu.core_type = #tpu.core_type<tc>, window_params = [{transform_indices = @transform_0, window_bounds = array<i64: 1, 16, 16, 128>}, {transform_indices = @transform_1, window_bounds = array<i64: 12, 128>}, {transform_indices = @transform_2, window_bounds = array<i64: 1, 16, 16, 128>}]} {
    %cst = arith.constant 0.000000e+00 : f32
    %0 = vector.broadcast %cst : f32 to vector<1x18x128xf32>
    %c0 = arith.constant 0 : index
    %c0_0 = arith.constant 0 : index
    %c0_1 = arith.constant 0 : index
    %1 = vector.load %arg5[%c0, %c0_0, %c0_1] : memref<18x18x128xf32, #tpu.memory_space<vmem>>, vector<1x18x128xf32>
    tpu.vector_store %arg5[%c0, %c0_0, %c0_1], %0 {strides = array<i32>} : memref<18x18x128xf32, #tpu.memory_space<vmem>>, vector<1x18x128xf32>,
    %cst_2 = arith.constant 0.000000e+00 : f32
    %2 = vector.broadcast %cst_2 : f32 to vector<1x18x128xf32>
    %c17 = arith.constant 17 : index
    %c0_3 = arith.constant 0 : index
    %c0_4 = arith.constant 0 : index
    %3 = vector.load %arg5[%c17, %c0_3, %c0_4] : memref<18x18x128xf32, #tpu.memory_space<vmem>>, vector<1x18x128xf32>
    tpu.vector_store %arg5[%c17, %c0_3, %c0_4], %2 {strides = array<i32>} : memref<18x18x128xf32, #tpu.memory_space<vmem>>, vector<1x18x128xf32>,
    %cst_5 = arith.constant 0.000000e+00 : f32
    %4 = vector.broadcast %cst_5 : f32 to vector<16x1x128xf32>
    %c1 = arith.constant 1 : index
    %c0_6 = arith.constant 0 : index
    %c0_7 = arith.constant 0 : index
    %5 = vector.load %arg5[%c1, %c0_6, %c0_7] : memref<18x18x128xf32, #tpu.memory_space<vmem>>, vector<16x1x128xf32>
    tpu.vector_store %arg5[%c1, %c0_6, %c0_7], %4 {strides = array<i32>} : memref<18x18x128xf32, #tpu.memory_space<vmem>>, vector<16x1x128xf32>,
    %cst_8 = arith.constant 0.000000e+00 : f32
    %6 = vector.broadcast %cst_8 : f32 to vector<16x1x128xf32>
    %c1_9 = arith.constant 1 : index
    %c17_10 = arith.constant 17 : index
    %c0_11 = arith.constant 0 : index
    %7 = vector.load %arg5[%c1_9, %c17_10, %c0_11] : memref<18x18x128xf32, #tpu.memory_space<vmem>>, vector<16x1x128xf32>
    tpu.vector_store %arg5[%c1_9, %c17_10, %c0_11], %6 {strides = array<i32>} : memref<18x18x128xf32, #tpu.memory_space<vmem>>, vector<16x1x128xf32>,
    %c0_12 = arith.constant 0 : index
    %c0_13 = arith.constant 0 : index
    %c0_14 = arith.constant 0 : index
    %c0_15 = arith.constant 0 : index
    %8 = vector.load %arg2[%c0_12, %c0_13, %c0_14, %c0_15] : memref<1x16x16x128xf32, #tpu.memory_space<vmem>>, vector<1x16x16x128xf32>
    %9 = vector.shape_cast %8 : vector<1x16x16x128xf32> to vector<16x16x128xf32>
    %c1_16 = arith.constant 1 : index
    %c1_17 = arith.constant 1 : index
    %c0_18 = arith.constant 0 : index
    %10 = vector.load %arg5[%c1_16, %c1_17, %c0_18] : memref<18x18x128xf32, #tpu.memory_space<vmem>>, vector<16x16x128xf32>
    tpu.vector_store %arg5[%c1_16, %c1_17, %c0_18], %9 {strides = array<i32>} : memref<18x18x128xf32, #tpu.memory_space<vmem>>, vector<16x16x128xf32>,
    %c0_19 = arith.constant 0 : index
    %c0_20 = arith.constant 0 : index
    %11 = vector.load %arg3[%c0_19, %c0_20] : memref<12x128xf32, #tpu.memory_space<vmem>>, vector<1x128xf32>
    %12 = vector.shape_cast %11 : vector<1x128xf32> to vector<1x1x128xf32>
    %c1_21 = arith.constant 1 : index
    %c0_22 = arith.constant 0 : index
    %13 = vector.load %arg3[%c1_21, %c0_22] : memref<12x128xf32, #tpu.memory_space<vmem>>, vector<1x128xf32>
    %14 = vector.shape_cast %13 : vector<1x128xf32> to vector<1x1x128xf32>
    %c2 = arith.constant 2 : index
    %c0_23 = arith.constant 0 : index
    %15 = vector.load %arg3[%c2, %c0_23] : memref<12x128xf32, #tpu.memory_space<vmem>>, vector<1x128xf32>
    %16 = vector.shape_cast %15 : vector<1x128xf32> to vector<1x1x128xf32>
    %c3 = arith.constant 3 : index
    %c0_24 = arith.constant 0 : index
    %17 = vector.load %arg3[%c3, %c0_24] : memref<12x128xf32, #tpu.memory_space<vmem>>, vector<1x128xf32>
    %18 = vector.shape_cast %17 : vector<1x128xf32> to vector<1x1x128xf32>
    %c4 = arith.constant 4 : index
    %c0_25 = arith.constant 0 : index
    %19 = vector.load %arg3[%c4, %c0_25] : memref<12x128xf32, #tpu.memory_space<vmem>>, vector<1x128xf32>
    %20 = vector.shape_cast %19 : vector<1x128xf32> to vector<1x1x128xf32>
    %c5 = arith.constant 5 : index
    %c0_26 = arith.constant 0 : index
    %21 = vector.load %arg3[%c5, %c0_26] : memref<12x128xf32, #tpu.memory_space<vmem>>, vector<1x128xf32>
    %22 = vector.shape_cast %21 : vector<1x128xf32> to vector<1x1x128xf32>
    %c6 = arith.constant 6 : index
    %c0_27 = arith.constant 0 : index
    %23 = vector.load %arg3[%c6, %c0_27] : memref<12x128xf32, #tpu.memory_space<vmem>>, vector<1x128xf32>
    %24 = vector.shape_cast %23 : vector<1x128xf32> to vector<1x1x128xf32>
    %c7 = arith.constant 7 : index
    %c0_28 = arith.constant 0 : index
    %25 = vector.load %arg3[%c7, %c0_28] : memref<12x128xf32, #tpu.memory_space<vmem>>, vector<1x128xf32>
    %26 = vector.shape_cast %25 : vector<1x128xf32> to vector<1x1x128xf32>
    %c8 = arith.constant 8 : index
    %c0_29 = arith.constant 0 : index
    %27 = vector.load %arg3[%c8, %c0_29] : memref<12x128xf32, #tpu.memory_space<vmem>>, vector<1x128xf32>
    %28 = vector.shape_cast %27 : vector<1x128xf32> to vector<1x1x128xf32>
    %c9 = arith.constant 9 : index
    %c0_30 = arith.constant 0 : index
    %29 = vector.load %arg3[%c9, %c0_30] : memref<12x128xf32, #tpu.memory_space<vmem>>, vector<1x128xf32>
    %30 = vector.shape_cast %29 : vector<1x128xf32> to vector<1x1x128xf32>
    %c10 = arith.constant 10 : index
    %c0_31 = arith.constant 0 : index
    %31 = vector.load %arg3[%c10, %c0_31] : memref<12x128xf32, #tpu.memory_space<vmem>>, vector<1x128xf32>
    %32 = vector.shape_cast %31 : vector<1x128xf32> to vector<1x1x128xf32>
    %c11 = arith.constant 11 : index
    %c0_32 = arith.constant 0 : index
    %33 = vector.load %arg3[%c11, %c0_32] : memref<12x128xf32, #tpu.memory_space<vmem>>, vector<1x128xf32>
    %34 = vector.shape_cast %33 : vector<1x128xf32> to vector<1x1x128xf32>
    %c0_i32 = arith.constant 0 : i32
    %c2_i32 = arith.constant 2 : i32
    %35 = arith.addi %c0_i32, %c2_i32 : i32
    %c1_i32 = arith.constant 1 : i32
    scf.for %arg6 = %c0_i32 to %35 step %c1_i32  : i32 {
      %c1_i32_34 = arith.constant 1 : i32
      %36 = arith.muli %arg6, %c1_i32_34 : i32
      %c0_i32_35 = arith.constant 0 : i32
      %37 = arith.addi %c0_i32_35, %36 : i32
      %c8_i32 = arith.constant 8 : i32
      %38 = arith.muli %37, %c8_i32 : i32
      %39 = tpu.assume_multiple %38, 8 : i32
      %40 = arith.index_cast %39 : i32 to index
      %c0_36 = arith.constant 0 : index
      %c0_37 = arith.constant 0 : index
      %41 = vector.load %arg5[%40, %c0_36, %c0_37] : memref<18x18x128xf32, #tpu.memory_space<vmem>>, vector<10x16x128xf32>
      %42 = vector.extract_strided_slice %41 {offsets = [0, 0, 0], sizes = [8, 16, 128], strides = [1, 1, 1]} : vector<10x16x128xf32> to vector<8x16x128xf32>
      %43 = vector.broadcast %12 : vector<1x1x128xf32> to vector<8x16x128xf32>
      %44 = arith.mulf %42, %43 : vector<8x16x128xf32>
      %45 = vector.extract_strided_slice %41 {offsets = [1, 0, 0], sizes = [8, 16, 128], strides = [1, 1, 1]} : vector<10x16x128xf32> to vector<8x16x128xf32>
      %46 = vector.broadcast %18 : vector<1x1x128xf32> to vector<8x16x128xf32>
      %47 = arith.mulf %45, %46 : vector<8x16x128xf32>
      %48 = arith.addf %44, %47 : vector<8x16x128xf32>
      %49 = vector.extract_strided_slice %41 {offsets = [2, 0, 0], sizes = [8, 16, 128], strides = [1, 1, 1]} : vector<10x16x128xf32> to vector<8x16x128xf32>
      %50 = vector.broadcast %24 : vector<1x1x128xf32> to vector<8x16x128xf32>
      %51 = arith.mulf %49, %50 : vector<8x16x128xf32>
      %52 = arith.addf %48, %51 : vector<8x16x128xf32>
      %53 = arith.index_cast %39 : i32 to index
      %c1_38 = arith.constant 1 : index
      %c0_39 = arith.constant 0 : index
      %54 = vector.load %arg5[%53, %c1_38, %c0_39] : memref<18x18x128xf32, #tpu.memory_space<vmem>>, vector<10x16x128xf32>
      %55 = vector.extract_strided_slice %54 {offsets = [0, 0, 0], sizes = [8, 16, 128], strides = [1, 1, 1]} : vector<10x16x128xf32> to vector<8x16x128xf32>
      %56 = vector.broadcast %14 : vector<1x1x128xf32> to vector<8x16x128xf32>
      %57 = arith.mulf %55, %56 : vector<8x16x128xf32>
      %58 = arith.addf %52, %57 : vector<8x16x128xf32>
      %59 = vector.extract_strided_slice %54 {offsets = [1, 0, 0], sizes = [8, 16, 128], strides = [1, 1, 1]} : vector<10x16x128xf32> to vector<8x16x128xf32>
      %60 = vector.broadcast %20 : vector<1x1x128xf32> to vector<8x16x128xf32>
      %61 = arith.mulf %59, %60 : vector<8x16x128xf32>
      %62 = arith.addf %58, %61 : vector<8x16x128xf32>
      %63 = vector.extract_strided_slice %54 {offsets = [2, 0, 0], sizes = [8, 16, 128], strides = [1, 1, 1]} : vector<10x16x128xf32> to vector<8x16x128xf32>
      %64 = vector.broadcast %26 : vector<1x1x128xf32> to vector<8x16x128xf32>
      %65 = arith.mulf %63, %64 : vector<8x16x128xf32>
      %66 = arith.addf %62, %65 : vector<8x16x128xf32>
      %67 = arith.index_cast %39 : i32 to index
      %c2_40 = arith.constant 2 : index
      %c0_41 = arith.constant 0 : index
      %68 = vector.load %arg5[%67, %c2_40, %c0_41] : memref<18x18x128xf32, #tpu.memory_space<vmem>>, vector<10x16x128xf32>
      %69 = vector.extract_strided_slice %68 {offsets = [0, 0, 0], sizes = [8, 16, 128], strides = [1, 1, 1]} : vector<10x16x128xf32> to vector<8x16x128xf32>
      %70 = vector.broadcast %16 : vector<1x1x128xf32> to vector<8x16x128xf32>
      %71 = arith.mulf %69, %70 : vector<8x16x128xf32>
      %72 = arith.addf %66, %71 : vector<8x16x128xf32>
      %73 = vector.extract_strided_slice %68 {offsets = [1, 0, 0], sizes = [8, 16, 128], strides = [1, 1, 1]} : vector<10x16x128xf32> to vector<8x16x128xf32>
      %74 = vector.broadcast %22 : vector<1x1x128xf32> to vector<8x16x128xf32>
      %75 = arith.mulf %73, %74 : vector<8x16x128xf32>
      %76 = arith.addf %72, %75 : vector<8x16x128xf32>
      %77 = vector.extract_strided_slice %68 {offsets = [2, 0, 0], sizes = [8, 16, 128], strides = [1, 1, 1]} : vector<10x16x128xf32> to vector<8x16x128xf32>
      %78 = vector.broadcast %28 : vector<1x1x128xf32> to vector<8x16x128xf32>
      %79 = arith.mulf %77, %78 : vector<8x16x128xf32>
      %80 = arith.addf %76, %79 : vector<8x16x128xf32>
      %81 = vector.broadcast %30 : vector<1x1x128xf32> to vector<8x16x128xf32>
      %82 = arith.addf %80, %81 : vector<8x16x128xf32>
      %83 = arith.mulf %82, %82 : vector<8x16x128xf32>
      %cst_42 = arith.constant 0.797884583 : f32
      %84 = vector.broadcast %cst_42 : f32 to vector<8x16x128xf32>
      %85 = arith.mulf %84, %82 : vector<8x16x128xf32>
      %cst_43 = arith.constant 4.471500e-02 : f32
      %86 = vector.broadcast %cst_43 : f32 to vector<8x16x128xf32>
      %87 = arith.mulf %86, %83 : vector<8x16x128xf32>
      %cst_44 = arith.constant 1.000000e+00 : f32
      %88 = vector.broadcast %cst_44 : f32 to vector<8x16x128xf32>
      %89 = arith.addf %88, %87 : vector<8x16x128xf32>
      %90 = arith.mulf %85, %89 : vector<8x16x128xf32>
      %cst_45 = arith.constant 5.000000e-01 : f32
      %91 = vector.broadcast %cst_45 : f32 to vector<8x16x128xf32>
      %92 = arith.mulf %91, %82 : vector<8x16x128xf32>
      %93 = math.tanh %90 : vector<8x16x128xf32>
      %cst_46 = arith.constant 1.000000e+00 : f32
      %94 = vector.broadcast %cst_46 : f32 to vector<8x16x128xf32>
      %95 = arith.addf %94, %93 : vector<8x16x128xf32>
      %96 = arith.mulf %92, %95 : vector<8x16x128xf32>
      %97 = vector.broadcast %32 : vector<1x1x128xf32> to vector<8x16x128xf32>
      %98 = arith.mulf %96, %97 : vector<8x16x128xf32>
      %99 = vector.broadcast %34 : vector<1x1x128xf32> to vector<8x16x128xf32>
      %100 = arith.addf %98, %99 : vector<8x16x128xf32>
      %c0_47 = arith.constant 0 : index
      %101 = arith.index_cast %39 : i32 to index
      %c0_48 = arith.constant 0 : index
      %c0_49 = arith.constant 0 : index
      %102 = vector.load %arg2[%c0_47, %101, %c0_48, %c0_49] : memref<1x16x16x128xf32, #tpu.memory_space<vmem>>, vector<1x8x16x128xf32>
      %103 = vector.shape_cast %102 : vector<1x8x16x128xf32> to vector<8x16x128xf32>
      %104 = arith.addf %100, %103 : vector<8x16x128xf32>
      %c0_50 = arith.constant 0 : index
      %105 = arith.index_cast %39 : i32 to index
      %c0_51 = arith.constant 0 : index
      %c0_52 = arith.constant 0 : index
      %106 = vector.load %arg4[%c0_50, %105, %c0_51, %c0_52] : memref<1x16x16x128xf32, #tpu.memory_space<vmem>>, vector<1x8x16x128xf32>
      %107 = vector.shape_cast %106 : vector<1x8x16x128xf32> to vector<8x16x128xf32>
      %108 = vector.shape_cast %104 : vector<8x16x128xf32> to vector<1x8x16x128xf32>
      tpu.vector_store %arg4[%c0_50, %105, %c0_51, %c0_52], %108 {strides = array<i32>} : memref<1x16x16x128xf32, #tpu.memory_space<vmem>>, vector<1x8x16x128xf32>,
    }
    %c2_i32_33 = arith.constant 2 : i32
    return
  }
  func.func @transform_0(%arg0: i32, %arg1: i32) -> (i32, i32, i32, i32) {
    %c0_i32 = arith.constant 0 : i32
    %c0_i32_0 = arith.constant 0 : i32
    %c0_i32_1 = arith.constant 0 : i32
    return %arg0, %c0_i32, %c0_i32_0, %arg1 : i32, i32, i32, i32
  }
  func.func @transform_1(%arg0: i32, %arg1: i32) -> (i32, i32) {
    %c0_i32 = arith.constant 0 : i32
    %c0_i32_0 = arith.constant 0 : i32
    return %c0_i32, %arg1 : i32, i32
  }
  func.func @transform_2(%arg0: i32, %arg1: i32) -> (i32, i32, i32, i32) {
    %c0_i32 = arith.constant 0 : i32
    %c0_i32_0 = arith.constant 0 : i32
    %c0_i32_1 = arith.constant 0 : i32
    return %arg0, %c0_i32, %c0_i32_0, %arg1 : i32, i32, i32, i32
  }
}

</mosaic_0001>

<llo_original>
// kernel: tpu_custom_call.1
$region0: #{tpu_custom_call.1}
  #allocation0 [shape = 'u32[]', space=smem, size = 0x4, offset = 0x4, fixed_abs, tag = 'smem constant byte address 0x4 - core index']
  #allocation1 [shape = 'u32[144,128]{1,0:T(1,128)}', space=vmem, size = 0x12000, scoped, tag = 'internal scratch']
  #allocation2 [shape = 'f32[18,18,128]{2,1,0:T(8,128)}', space=vmem, size = 0x36000, scoped, tag = 'scratch operand']
  %s0 = inlined_call_operand.hbm [shape: f32[2,16,16,256], index: 0, kind: input, shape index: {}]
  %s1 = inlined_call_operand.hbm [shape: f32[12,256], index: 1, kind: input, shape index: {}]
  %s2 = inlined_call_operand.hbm [shape: f32[2,16,16,256], index: 2, kind: output, shape index: {}]
  %s3 = sld [smem:[#allocation0]]
  $region56: #{tpu_custom_call.1} parent=0
    _
  %s5 = ssub.s32 1, %s3
  %s6 = scalar_select 0, %s5, %s3
  $region1: #{tpu_custom_call.1} parent=0
    #allocation3 [shape = 'u8[262144]{0}', space=vmem, size = 0x40000, scoped, tag = 'input window, operand 0']
    #allocation4 [shape = 's32[2]{0}', space=sflag, size = 0x8, scoped, tag = 'scoped memory for tpu_custom_call.1']
    #allocation5 [shape = 's32[2]{0}', space=sflag, size = 0x8, scoped, tag = 'scoped memory for tpu_custom_call.1']
    #allocation6 [shape = 'u8[16384]{0}', space=vmem, size = 0x4000, scoped, tag = 'input window, operand 1']
    #allocation7 [shape = 's32[2]{0}', space=sflag, size = 0x8, scoped, tag = 'scoped memory for tpu_custom_call.1']
    #allocation8 [shape = 'u8[262144]{0}', space=vmem, size = 0x40000, scoped, tag = 'output window, operand 0']
    %7 = vsyncpa [#allocation4], 0
    %s8 = scalar_lea.sflag [#allocation4], 1
    %9 = vsyncpa %s8, 0
    %10 = vsyncpa [#allocation7], 0
    %s11 = scalar_lea.sflag [#allocation7], 1
    %12 = vsyncpa %s11, 0
    %13 = vsyncpa [#allocation5], 0
    %s14 = scalar_lea.sflag [#allocation5], 1
    %15 = vsyncpa %s14, 0
    loop: start=0, step=1, limit=6
    $region2: #{tpu_custom_call.1} parent=1 // loop_pre_header
      _
    $region3: #{tpu_custom_call.1} parent=1 // loop_header
      %s17 = sphi 0, %s21
      %p18 = scmp.ge.s32.totalorder %s17, 6
      %s24 = sphi 0, %s36
      %s25 = sphi 0, %s32
      %s26 = sphi 0, %s24
      %s27 = sphi 0, %s25
      %s28 = sphi 0, %s26
      %s29 = sphi 0, %s27
      %s41 = sphi 0, %s43
      %s44 = sphi 0, %s41
      %s45 = sphi 0, %s44
      %s61 = sphi 0, %s45
      %s67 = sphi 0, %s69
      %s70 = sphi 0, %s67
      %s71 = sphi 0, %s70
      %s87 = sphi 0, %s71
      %s95 = sphi 0, %s97
      %s98 = sphi 0, %s95
      %s99 = sphi 0, %s98
      %s115 = sphi 0, %s99
    $region4: #{tpu_custom_call.1} parent=1 // loop_header_branch
      %20 = sbr.rel (%p18) target = $region8
    $region5: #{tpu_custom_call.1} parent=1 // loop_body
      %s22 = ssub.s32 %s17, 1
      %s23 = ssub.s32 %s17, 2
      %s30 = sadd.s32 1, %s25
      %p31 = scmp.ge.s32.totalorder %s30, 2
      %s32 = scalar_select %p31, 0, %s30
      %s33 = sadd.s32 1, %s24
      %s34 = scalar_select %p31, %s33, %s24
      %p35 = scmp.ge.s32.totalorder %s34, 2
      %s36 = scalar_select %p35, 0, %s34
      %s37 = ssub.s32 %s24, %s36
      %s38 = ssub.s32 %s25, %s32
      %s39 = sor.u32 %s37, %s38
      %p40 = scmp.eq.s32.totalorder %s39, 0
      %s42 = sadd.s32 %s41, 1
      %s43 = scalar_select %p40, %s41, %s42
      %p46 = pneg %p40
      %p47 = scmp.eq.s32.totalorder %s17, 3
      %p48 = por %p46, %p47
      %p49 = scmp.ne.s32.totalorder %s41, %s44
      %p50 = scmp.eq.s32.totalorder %s17, 0
      %p51 = por %p49, %p50
      %p52 = scmp.ne.s32.totalorder %s41, %s44
      %p53 = scmp.eq.s32.totalorder %s22, 3
      %p54 = por %p52, %p53
      %p55 = scmp.ne.s32.totalorder %s44, %s45
      %p56 = scmp.eq.s32.totalorder %s22, 0
      %p57 = por %p55, %p56
      %p58 = scmp.ne.s32.totalorder %s44, %s45
      %p59 = scmp.eq.s32.totalorder %s23, 3
      %p60 = por %p58, %p59
      %p62 = scmp.ne.s32.totalorder %s45, %s61
      %p63 = scmp.eq.s32.totalorder %s23, 0
      %p64 = por %p62, %p63
      %s65 = ssub.s32 %s25, %s32
      %p66 = scmp.eq.s32.totalorder %s65, 0
      %s68 = sadd.s32 %s67, 1
      %s69 = scalar_select %p66, %s67, %s68
      %p72 = pneg %p66
      %p73 = scmp.eq.s32.totalorder %s17, 3
      %p74 = por %p72, %p73
      %p75 = scmp.ne.s32.totalorder %s67, %s70
      %p76 = scmp.eq.s32.totalorder %s17, 0
      %p77 = por %p75, %p76
      %p78 = scmp.ne.s32.totalorder %s67, %s70
      %p79 = scmp.eq.s32.totalorder %s22, 3
      %p80 = por %p78, %p79
      %p81 = scmp.ne.s32.totalorder %s70, %s71
      %p82 = scmp.eq.s32.totalorder %s22, 0
      %p83 = por %p81, %p82
      %p84 = scmp.ne.s32.totalorder %s70, %s71
      %p85 = scmp.eq.s32.totalorder %s23, 3
      %p86 = por %p84, %p85
      %p88 = scmp.ne.s32.totalorder %s71, %s87
      %p89 = scmp.eq.s32.totalorder %s23, 0
      %p90 = por %p88, %p89
      %s91 = ssub.s32 %s24, %s36
      %s92 = ssub.s32 %s25, %s32
      %s93 = sor.u32 %s91, %s92
      %p94 = scmp.eq.s32.totalorder %s93, 0
      %s96 = sadd.s32 %s95, 1
      %s97 = scalar_select %p94, %s95, %s96
      %p100 = pneg %p94
      %p101 = scmp.eq.s32.totalorder %s17, 3
      %p102 = por %p100, %p101
      %p103 = scmp.ne.s32.totalorder %s95, %s98
      %p104 = scmp.eq.s32.totalorder %s17, 0
      %p105 = por %p103, %p104
      %p106 = scmp.ne.s32.totalorder %s95, %s98
      %p107 = scmp.eq.s32.totalorder %s22, 3
      %p108 = por %p106, %p107
      %p109 = scmp.ne.s32.totalorder %s98, %s99
      %p110 = scmp.eq.s32.totalorder %s22, 0
      %p111 = por %p109, %p110
      %p112 = scmp.ne.s32.totalorder %s98, %s99
      %p113 = scmp.eq.s32.totalorder %s23, 3
      %p114 = por %p112, %p113
      %p116 = scmp.ne.s32.totalorder %s99, %s115
      %p117 = scmp.eq.s32.totalorder %s23, 0
      %p118 = por %p116, %p117
      %p119 = scmp.le.s32.totalorder 1, %s17
      %p120 = scmp.lt.s32.totalorder %s17, 5
      %p121 = pnand %p119, %p120
      %p122 = pneg %p121
      // Predicated region
      $region9: #{tpu_custom_call.1} parent=5 // pred_check
        _
      $region10: #{tpu_custom_call.1} parent=5 // pred_check_branch
        %124 = sbr.rel (%p121) target = $region12
      $region11: #{tpu_custom_call.1} parent=5 // pred_region
        %s125 = ssub.s32 %s17, 1
      $region12: #{tpu_custom_call.1} parent=5 // pred_fallthru
        _
      %p126 = scmp.lt.s32.totalorder %s17, 4
      // Predicated region
      $region13: #{tpu_custom_call.1} parent=5 // pred_check
        %p127 = pneg %p126
      $region14: #{tpu_custom_call.1} parent=5 // pred_check_branch
        %129 = sbr.rel (%p127) target = $region16
      $region15: #{tpu_custom_call.1} parent=5 // pred_region
        // Predicated region
        $region17: #{tpu_custom_call.1} parent=15 // pred_check
          %p130 = pneg %p51
        $region18: #{tpu_custom_call.1} parent=15 // pred_check_branch
          %132 = sbr.rel (%p130) target = $region20
        $region19: #{tpu_custom_call.1} parent=15 // pred_region
          %s133 = sand.u32 %s41, 1
          %s134 = scalar_lea.sflag [#allocation4], %s133
          %s135 = sand.u32 %s41, 1
          %s136 = smul.addr %s135, 256
          %s137 = scalar_lea.vmem [#allocation3], %s136
          %s139 = ssub.s32 4096, 4096
          %140 = vsyncadd %s134, %s139
          %s141 = smul.addr %s24, 64
          %s142 = sadd.s32 %s25, %s141
          %s143 = smul.addr %s142, 128
          %s144 = scalar_lea.hbm %s0, %s143
          %s145 = sshll.u32 %s137, 4
          %s146 = int_to_ptr.vmem [resolvable:$true] %s145
          %151 = dma.hbm_to_vmem [thread:$0]  %s144, 4096, %s146, %s134, 256, 128, 8
        $region20: #{tpu_custom_call.1} parent=15 // pred_fallthru
          _
        // Predicated region
        $region21: #{tpu_custom_call.1} parent=15 // pred_check
          %p152 = pneg %p77
        $region22: #{tpu_custom_call.1} parent=15 // pred_check_branch
          %154 = sbr.rel (%p152) target = $region24
        $region23: #{tpu_custom_call.1} parent=15 // pred_region
          %s155 = sand.u32 %s67, 1
          %s156 = scalar_lea.sflag [#allocation7], %s155
          %s157 = sand.u32 %s67, 1
          %s158 = smul.addr %s157, 16
          %s159 = scalar_lea.vmem [#allocation6], %s158
          %s161 = ssub.s32 256, 256
          %162 = vsyncadd %s156, %s161
          %s163 = smul.addr %s25, 128
          %s164 = scalar_lea.hbm %s1, %s163
          %s165 = sshll.u32 %s159, 4
          %s166 = int_to_ptr.vmem [resolvable:$true] %s165
          %171 = dma.hbm_to_vmem [thread:$0]  %s164, 256, %s166, %s156, 256, 128, 8
        $region24: #{tpu_custom_call.1} parent=15 // pred_fallthru
          _
      $region16: #{tpu_custom_call.1} parent=5 // pred_fallthru
        _
      %p172 = scmp.le.s32.totalorder 1, %s17
      %p173 = scmp.lt.s32.totalorder %s17, 5
      %p174 = pnand %p172, %p173
      %p175 = pneg %p174
      // Predicated region
      $region25: #{tpu_custom_call.1} parent=5 // pred_check
        _
      $region26: #{tpu_custom_call.1} parent=5 // pred_check_branch
        %177 = sbr.rel (%p174) target = $region28
      $region27: #{tpu_custom_call.1} parent=5 // pred_region
        %s178 = ssub.s32 %s17, 1
        %s179 = sand.u32 %s44, 1
        %s180 = scalar_lea.sflag [#allocation4], %s179
        %s181 = sand.u32 %s44, 1
        %s182 = smul.addr %s181, 256
        %s183 = scalar_lea.vmem [#allocation3], %s182
        // Predicated region
        $region29: #{tpu_custom_call.1} parent=27 // pred_check
          %p184 = pneg %p57
        $region30: #{tpu_custom_call.1} parent=27 // pred_check_branch
          %186 = sbr.rel (%p184) target = $region32
        $region31: #{tpu_custom_call.1} parent=27 // pred_region
          %187 = dma.done %s180, 4096
        $region32: #{tpu_custom_call.1} parent=27 // pred_fallthru
          _
        %s188 = sand.u32 %s70, 1
        %s189 = scalar_lea.sflag [#allocation7], %s188
        %s190 = sand.u32 %s70, 1
        %s191 = smul.addr %s190, 16
        %s192 = scalar_lea.vmem [#allocation6], %s191
        // Predicated region
        $region33: #{tpu_custom_call.1} parent=27 // pred_check
          %p193 = pneg %p83
        $region34: #{tpu_custom_call.1} parent=27 // pred_check_branch
          %195 = sbr.rel (%p193) target = $region36
        $region35: #{tpu_custom_call.1} parent=27 // pred_region
          %196 = dma.done %s189, 256
        $region36: #{tpu_custom_call.1} parent=27 // pred_fallthru
          _
        %s197 = sand.u32 %s44, 1
        %s198 = scalar_lea.sflag [#allocation4], %s197
        %s199 = sand.u32 %s44, 1
        %s200 = smul.addr %s199, 256
        %s201 = scalar_lea.vmem [#allocation3], %s200
        %p202 = pneg %p57
        %p203 = pneg %p54
        %s204 = sand.u32 %s70, 1
        %s205 = scalar_lea.sflag [#allocation7], %s204
        %s206 = sand.u32 %s70, 1
        %s207 = smul.addr %s206, 16
        %s208 = scalar_lea.vmem [#allocation6], %s207
        %p209 = pneg %p83
        %p210 = pneg %p80
        %p211 = pneg %p111
        %p212 = pneg %p108
        %s213 = sand.u32 %s98, 1
        %s214 = scalar_lea.sflag [#allocation5], %s213
        %s215 = sand.u32 %s98, 1
        %s216 = smul.addr %s215, 256
        %s217 = scalar_lea.vmem [#allocation8], %s216
        %218 = vst [vmem:[#allocation2] sm:$0xff] 0.0
        %219 = vst [vmem:[#allocation2 + $0x8] sm:$0xff] 0.0
        %220 = vst [vmem:[#allocation2 + $0x10] sm:$0x3] 0.0
        %s221 = scalar_lea.vmem [#allocation2], 408
        %222 = vst [vmem:[%s221] sm:$0xff] 0.0
        %223 = vst [vmem:[%s221 + $0x8] sm:$0xff] 0.0
        %224 = vst [vmem:[%s221 + $0x10] sm:$0x3] 0.0
        %s225 = scalar_lea.vmem [#allocation2], 24
        %226 = vst [vmem:[%s225] sm:$0x1] 0.0
        %227 = vst [vmem:[%s225 + $0x18] sm:$0x1] 0.0
        %228 = vst [vmem:[%s225 + $0x30] sm:$0x1] 0.0
        %229 = vst [vmem:[%s225 + $0x48] sm:$0x1] 0.0
        %230 = vst [vmem:[%s225 + $0x60] sm:$0x1] 0.0
        %231 = vst [vmem:[%s225 + $0x78] sm:$0x1] 0.0
        %232 = vst [vmem:[%s225 + $0x90] sm:$0x1] 0.0
        %233 = vst [vmem:[%s225 + $0xa8] sm:$0x1] 0.0
        %234 = vst [vmem:[%s225 + $0xc0] sm:$0x1] 0.0
        %235 = vst [vmem:[%s225 + $0xd8] sm:$0x1] 0.0
        %236 = vst [vmem:[%s225 + $0xf0] sm:$0x1] 0.0
        %237 = vst [vmem:[%s225 + $0x108] sm:$0x1] 0.0
        %238 = vst [vmem:[%s225 + $0x120] sm:$0x1] 0.0
        %239 = vst [vmem:[%s225 + $0x138] sm:$0x1] 0.0
        %240 = vst [vmem:[%s225 + $0x150] sm:$0x1] 0.0
        %241 = vst [vmem:[%s225 + $0x168] sm:$0x1] 0.0
        %242 = vst [vmem:[%s225 + $0x11] sm:$0x1] 0.0
        %243 = vst [vmem:[%s225 + $0x29] sm:$0x1] 0.0
        %244 = vst [vmem:[%s225 + $0x41] sm:$0x1] 0.0
        %245 = vst [vmem:[%s225 + $0x59] sm:$0x1] 0.0
        %246 = vst [vmem:[%s225 + $0x71] sm:$0x1] 0.0
        %247 = vst [vmem:[%s225 + $0x89] sm:$0x1] 0.0
        %248 = vst [vmem:[%s225 + $0xa1] sm:$0x1] 0.0
        %249 = vst [vmem:[%s225 + $0xb9] sm:$0x1] 0.0
        %250 = vst [vmem:[%s225 + $0xd1] sm:$0x1] 0.0
        %251 = vst [vmem:[%s225 + $0xe9] sm:$0x1] 0.0
        %252 = vst [vmem:[%s225 + $0x101] sm:$0x1] 0.0
        %253 = vst [vmem:[%s225 + $0x119] sm:$0x1] 0.0
        %254 = vst [vmem:[%s225 + $0x131] sm:$0x1] 0.0
        %255 = vst [vmem:[%s225 + $0x149] sm:$0x1] 0.0
        %256 = vst [vmem:[%s225 + $0x161] sm:$0x1] 0.0
        %257 = vst [vmem:[%s225 + $0x179] sm:$0x1] 0.0
        %v258 = vld [vmem:[%s183] sm:$0xff]
        %v259 = vld [vmem:[%s183 + $0x8] sm:$0xff]
        %v260 = vld [vmem:[%s183 + $0x10] sm:$0xff]
        %v261 = vld [vmem:[%s183 + $0x18] sm:$0xff]
        %v262 = vld [vmem:[%s183 + $0x20] sm:$0xff]
        %v263 = vld [vmem:[%s183 + $0x28] sm:$0xff]
        %v264 = vld [vmem:[%s183 + $0x30] sm:$0xff]
        %v265 = vld [vmem:[%s183 + $0x38] sm:$0xff]
        %v266 = vld [vmem:[%s183 + $0x40] sm:$0xff]
        %v267 = vld [vmem:[%s183 + $0x48] sm:$0xff]
        %v268 = vld [vmem:[%s183 + $0x50] sm:$0xff]
        %v269 = vld [vmem:[%s183 + $0x58] sm:$0xff]
        %v270 = vld [vmem:[%s183 + $0x60] sm:$0xff]
        %v271 = vld [vmem:[%s183 + $0x68] sm:$0xff]
        %v272 = vld [vmem:[%s183 + $0x70] sm:$0xff]
        %v273 = vld [vmem:[%s183 + $0x78] sm:$0xff]
        %v274 = vld [vmem:[%s183 + $0x80] sm:$0xff]
        %v275 = vld [vmem:[%s183 + $0x88] sm:$0xff]
        %v276 = vld [vmem:[%s183 + $0x90] sm:$0xff]
        %v277 = vld [vmem:[%s183 + $0x98] sm:$0xff]
        %v278 = vld [vmem:[%s183 + $0xa0] sm:$0xff]
        %v279 = vld [vmem:[%s183 + $0xa8] sm:$0xff]
        %v280 = vld [vmem:[%s183 + $0xb0] sm:$0xff]
        %v281 = vld [vmem:[%s183 + $0xb8] sm:$0xff]
        %v282 = vld [vmem:[%s183 + $0xc0] sm:$0xff]
        %v283 = vld [vmem:[%s183 + $0xc8] sm:$0xff]
        %v284 = vld [vmem:[%s183 + $0xd0] sm:$0xff]
        %v285 = vld [vmem:[%s183 + $0xd8] sm:$0xff]
        %v286 = vld [vmem:[%s183 + $0xe0] sm:$0xff]
        %v287 = vld [vmem:[%s183 + $0xe8] sm:$0xff]
        %v288 = vld [vmem:[%s183 + $0xf0] sm:$0xff]
        %v289 = vld [vmem:[%s183 + $0xf8] sm:$0xff]
        %290 = vst [vmem:[%s225 + $0x1] sm:$0xff] %v258
        %291 = vst [vmem:[%s225 + $0x9] sm:$0xff] %v259
        %292 = vst [vmem:[%s225 + $0x19] sm:$0xff] %v260
        %293 = vst [vmem:[%s225 + $0x21] sm:$0xff] %v261
        %294 = vst [vmem:[%s225 + $0x31] sm:$0xff] %v262
        %295 = vst [vmem:[%s225 + $0x39] sm:$0xff] %v263
        %296 = vst [vmem:[%s225 + $0x49] sm:$0xff] %v264
        %297 = vst [vmem:[%s225 + $0x51] sm:$0xff] %v265
        %298 = vst [vmem:[%s225 + $0x61] sm:$0xff] %v266
        %299 = vst [vmem:[%s225 + $0x69] sm:$0xff] %v267
        %300 = vst [vmem:[%s225 + $0x79] sm:$0xff] %v268
        %301 = vst [vmem:[%s225 + $0x81] sm:$0xff] %v269
        %302 = vst [vmem:[%s225 + $0x91] sm:$0xff] %v270
        %303 = vst [vmem:[%s225 + $0x99] sm:$0xff] %v271
        %304 = vst [vmem:[%s225 + $0xa9] sm:$0xff] %v272
        %305 = vst [vmem:[%s225 + $0xb1] sm:$0xff] %v273
        %306 = vst [vmem:[%s225 + $0xc1] sm:$0xff] %v274
        %307 = vst [vmem:[%s225 + $0xc9] sm:$0xff] %v275
        %308 = vst [vmem:[%s225 + $0xd9] sm:$0xff] %v276
        %309 = vst [vmem:[%s225 + $0xe1] sm:$0xff] %v277
        %310 = vst [vmem:[%s225 + $0xf1] sm:$0xff] %v278
        %311 = vst [vmem:[%s225 + $0xf9] sm:$0xff] %v279
        %312 = vst [vmem:[%s225 + $0x109] sm:$0xff] %v280
        %313 = vst [vmem:[%s225 + $0x111] sm:$0xff] %v281
        %314 = vst [vmem:[%s225 + $0x121] sm:$0xff] %v282
        %315 = vst [vmem:[%s225 + $0x129] sm:$0xff] %v283
        %316 = vst [vmem:[%s225 + $0x139] sm:$0xff] %v284
        %317 = vst [vmem:[%s225 + $0x141] sm:$0xff] %v285
        %318 = vst [vmem:[%s225 + $0x151] sm:$0xff] %v286
        %319 = vst [vmem:[%s225 + $0x159] sm:$0xff] %v287
        %320 = vst [vmem:[%s225 + $0x169] sm:$0xff] %v288
        %321 = vst [vmem:[%s225 + $0x171] sm:$0xff] %v289
        %v322 = vld [vmem:[%s192] sm:$0x1]
        %v323 = vld [vmem:[%s192 + $0x1] sm:$0x1]
        %v324 = vld [vmem:[%s192 + $0x2] sm:$0x1]
        %v325 = vld [vmem:[%s192 + $0x3] sm:$0x1]
        %v326 = vld [vmem:[%s192 + $0x4] sm:$0x1]
        %v327 = vld [vmem:[%s192 + $0x5] sm:$0x1]
        %v328 = vld [vmem:[%s192 + $0x6] sm:$0x1]
        %v329 = vld [vmem:[%s192 + $0x7] sm:$0x1]
        %v330 = vld [vmem:[%s192 + $0x8] sm:$0x1]
        %v331 = vld [vmem:[%s192 + $0x9] sm:$0x1]
        %v332 = vld [vmem:[%s192 + $0xa] sm:$0x1]
        %v333 = vld [vmem:[%s192 + $0xb] sm:$0x1]
        loop: start=0, step=1, limit=2
        $region37: #{tpu_custom_call.1} parent=27 // loop_pre_header
          _
        $region38: #{tpu_custom_call.1} parent=27 // loop_header
          %s335 = sphi 0, %s339
          %p336 = scmp.ge.s32.totalorder %s335, 2
        $region39: #{tpu_custom_call.1} parent=27 // loop_header_branch
          %338 = sbr.rel (%p336) target = $region43
        $region40: #{tpu_custom_call.1} parent=27 // loop_body
          %s340 = smul.u32 %s335, 8
          %s341 = smul.u32 %s340, 24
          %s342 = scalar_lea.vmem [#allocation2], %s341
          %v343 = vld [vmem:[%s342] sm:$0xff]
          %v344 = vld [vmem:[%s342 + $0x8] sm:$0xff]
          %v345 = vld [vmem:[%s342 + $0x18] sm:$0xff]
          %v346 = vld [vmem:[%s342 + $0x20] sm:$0xff]
          %v347 = vld [vmem:[%s342 + $0x30] sm:$0xff]
          %v348 = vld [vmem:[%s342 + $0x38] sm:$0xff]
          %v349 = vld [vmem:[%s342 + $0x48] sm:$0xff]
          %v350 = vld [vmem:[%s342 + $0x50] sm:$0xff]
          %v351 = vld [vmem:[%s342 + $0x60] sm:$0xff]
          %v352 = vld [vmem:[%s342 + $0x68] sm:$0xff]
          %v353 = vld [vmem:[%s342 + $0x78] sm:$0xff]
          %v354 = vld [vmem:[%s342 + $0x80] sm:$0xff]
          %v355 = vld [vmem:[%s342 + $0x90] sm:$0xff]
          %v356 = vld [vmem:[%s342 + $0x98] sm:$0xff]
          %v357 = vld [vmem:[%s342 + $0xa8] sm:$0xff]
          %v358 = vld [vmem:[%s342 + $0xb0] sm:$0xff]
          %v359 = vld [vmem:[%s342 + $0xc0] sm:$0xff]
          %v360 = vld [vmem:[%s342 + $0xc8] sm:$0xff]
          %v361 = vld [vmem:[%s342 + $0xd8] sm:$0xff]
          %v362 = vld [vmem:[%s342 + $0xe0] sm:$0xff]
          %v363 = vlaneseq
          %v364 = vshrl.u32 %v363, 7
          %v365 = vsub.s32 0, %v364
          %v366 = vrot.slane %v322, %v365
          %v367 = vmul.f32 %v343, %v366
          %v368 = vmul.f32 %v344, %v366
          %v369 = vmul.f32 %v345, %v366
          %v370 = vmul.f32 %v346, %v366
          %v371 = vmul.f32 %v347, %v366
          %v372 = vmul.f32 %v348, %v366
          %v373 = vmul.f32 %v349, %v366
          %v374 = vmul.f32 %v350, %v366
          %v375 = vmul.f32 %v351, %v366
          %v376 = vmul.f32 %v352, %v366
          %v377 = vmul.f32 %v353, %v366
          %v378 = vmul.f32 %v354, %v366
          %v379 = vmul.f32 %v355, %v366
          %v380 = vmul.f32 %v356, %v366
          %v381 = vmul.f32 %v357, %v366
          %v382 = vmul.f32 %v358, %v366
          %v383 = vlaneseq
          %v384 = vshrl.u32 %v383, 7
          %v385 = vsub.s32 0, %v384
          %v386 = vrot.slane %v325, %v385
          %v387 = vmul.f32 %v345, %v386
          %v388 = vmul.f32 %v346, %v386
          %v389 = vmul.f32 %v347, %v386
          %v390 = vmul.f32 %v348, %v386
          %v391 = vmul.f32 %v349, %v386
          %v392 = vmul.f32 %v350, %v386
          %v393 = vmul.f32 %v351, %v386
          %v394 = vmul.f32 %v352, %v386
          %v395 = vmul.f32 %v353, %v386
          %v396 = vmul.f32 %v354, %v386
          %v397 = vmul.f32 %v355, %v386
          %v398 = vmul.f32 %v356, %v386
          %v399 = vmul.f32 %v357, %v386
          %v400 = vmul.f32 %v358, %v386
          %v401 = vmul.f32 %v359, %v386
          %v402 = vmul.f32 %v360, %v386
          %v403 = vadd.f32 %v367, %v387
          %v404 = vadd.f32 %v368, %v388
          %v405 = vadd.f32 %v369, %v389
          %v406 = vadd.f32 %v370, %v390
          %v407 = vadd.f32 %v371, %v391
          %v408 = vadd.f32 %v372, %v392
          %v409 = vadd.f32 %v373, %v393
          %v410 = vadd.f32 %v374, %v394
          %v411 = vadd.f32 %v375, %v395
          %v412 = vadd.f32 %v376, %v396
          %v413 = vadd.f32 %v377, %v397
          %v414 = vadd.f32 %v378, %v398
          %v415 = vadd.f32 %v379, %v399
          %v416 = vadd.f32 %v380, %v400
          %v417 = vadd.f32 %v381, %v401
          %v418 = vadd.f32 %v382, %v402
          %v419 = vlaneseq
          %v420 = vshrl.u32 %v419, 7
          %v421 = vsub.s32 0, %v420
          %v422 = vrot.slane %v328, %v421
          %v423 = vmul.f32 %v347, %v422
          %v424 = vmul.f32 %v348, %v422
          %v425 = vmul.f32 %v349, %v422
          %v426 = vmul.f32 %v350, %v422
          %v427 = vmul.f32 %v351, %v422
          %v428 = vmul.f32 %v352, %v422
          %v429 = vmul.f32 %v353, %v422
          %v430 = vmul.f32 %v354, %v422
          %v431 = vmul.f32 %v355, %v422
          %v432 = vmul.f32 %v356, %v422
          %v433 = vmul.f32 %v357, %v422
          %v434 = vmul.f32 %v358, %v422
          %v435 = vmul.f32 %v359, %v422
          %v436 = vmul.f32 %v360, %v422
          %v437 = vmul.f32 %v361, %v422
          %v438 = vmul.f32 %v362, %v422
          %v439 = vadd.f32 %v403, %v423
          %v440 = vadd.f32 %v404, %v424
          %v441 = vadd.f32 %v405, %v425
          %v442 = vadd.f32 %v406, %v426
          %v443 = vadd.f32 %v407, %v427
          %v444 = vadd.f32 %v408, %v428
          %v445 = vadd.f32 %v409, %v429
          %v446 = vadd.f32 %v410, %v430
          %v447 = vadd.f32 %v411, %v431
          %v448 = vadd.f32 %v412, %v432
          %v449 = vadd.f32 %v413, %v433
          %v450 = vadd.f32 %v414, %v434
          %v451 = vadd.f32 %v415, %v435
          %v452 = vadd.f32 %v416, %v436
          %v453 = vadd.f32 %v417, %v437
          %v454 = vadd.f32 %v418, %v438
          %v455 = vld [vmem:[%s342 + $0x1] sm:$0xff]
          %v456 = vld [vmem:[%s342 + $0x9] sm:$0xff]
          %v457 = vld [vmem:[%s342 + $0x19] sm:$0xff]
          %v458 = vld [vmem:[%s342 + $0x21] sm:$0xff]
          %v459 = vld [vmem:[%s342 + $0x31] sm:$0xff]
          %v460 = vld [vmem:[%s342 + $0x39] sm:$0xff]
          %v461 = vld [vmem:[%s342 + $0x49] sm:$0xff]
          %v462 = vld [vmem:[%s342 + $0x51] sm:$0xff]
          %v463 = vld [vmem:[%s342 + $0x61] sm:$0xff]
          %v464 = vld [vmem:[%s342 + $0x69] sm:$0xff]
          %v465 = vld [vmem:[%s342 + $0x79] sm:$0xff]
          %v466 = vld [vmem:[%s342 + $0x81] sm:$0xff]
          %v467 = vld [vmem:[%s342 + $0x91] sm:$0xff]
          %v468 = vld [vmem:[%s342 + $0x99] sm:$0xff]
          %v469 = vld [vmem:[%s342 + $0xa9] sm:$0xff]
          %v470 = vld [vmem:[%s342 + $0xb1] sm:$0xff]
          %v471 = vld [vmem:[%s342 + $0xc1] sm:$0xff]
          %v472 = vld [vmem:[%s342 + $0xc9] sm:$0xff]
          %v473 = vld [vmem:[%s342 + $0xd9] sm:$0xff]
          %v474 = vld [vmem:[%s342 + $0xe1] sm:$0xff]
          %v475 = vlaneseq
          %v476 = vshrl.u32 %v475, 7
          %v477 = vsub.s32 0, %v476
          %v478 = vrot.slane %v323, %v477
          %v479 = vmul.f32 %v455, %v478
          %v480 = vmul.f32 %v456, %v478
          %v481 = vmul.f32 %v457, %v478
          %v482 = vmul.f32 %v458, %v478
          %v483 = vmul.f32 %v459, %v478
          %v484 = vmul.f32 %v460, %v478
          %v485 = vmul.f32 %v461, %v478
          %v486 = vmul.f32 %v462, %v478
          %v487 = vmul.f32 %v463, %v478
          %v488 = vmul.f32 %v464, %v478
          %v489 = vmul.f32 %v465, %v478
          %v490 = vmul.f32 %v466, %v478
          %v491 = vmul.f32 %v467, %v478
          %v492 = vmul.f32 %v468, %v478
          %v493 = vmul.f32 %v469, %v478
          %v494 = vmul.f32 %v470, %v478
          %v495 = vadd.f32 %v439, %v479
          %v496 = vadd.f32 %v440, %v480
          %v497 = vadd.f32 %v441, %v481
          %v498 = vadd.f32 %v442, %v482
          %v499 = vadd.f32 %v443, %v483
          %v500 = vadd.f32 %v444, %v484
          %v501 = vadd.f32 %v445, %v485
          %v502 = vadd.f32 %v446, %v486
          %v503 = vadd.f32 %v447, %v487
          %v504 = vadd.f32 %v448, %v488
          %v505 = vadd.f32 %v449, %v489
          %v506 = vadd.f32 %v450, %v490
          %v507 = vadd.f32 %v451, %v491
          %v508 = vadd.f32 %v452, %v492
          %v509 = vadd.f32 %v453, %v493
          %v510 = vadd.f32 %v454, %v494
          %v511 = vlaneseq
          %v512 = vshrl.u32 %v511, 7
          %v513 = vsub.s32 0, %v512
          %v514 = vrot.slane %v326, %v513
          %v515 = vmul.f32 %v457, %v514
          %v516 = vmul.f32 %v458, %v514
          %v517 = vmul.f32 %v459, %v514
          %v518 = vmul.f32 %v460, %v514
          %v519 = vmul.f32 %v461, %v514
          %v520 = vmul.f32 %v462, %v514
          %v521 = vmul.f32 %v463, %v514
          %v522 = vmul.f32 %v464, %v514
          %v523 = vmul.f32 %v465, %v514
          %v524 = vmul.f32 %v466, %v514
          %v525 = vmul.f32 %v467, %v514
          %v526 = vmul.f32 %v468, %v514
          %v527 = vmul.f32 %v469, %v514
          %v528 = vmul.f32 %v470, %v514
          %v529 = vmul.f32 %v471, %v514
          %v530 = vmul.f32 %v472, %v514
          %v531 = vadd.f32 %v495, %v515
          %v532 = vadd.f32 %v496, %v516
          %v533 = vadd.f32 %v497, %v517
          %v534 = vadd.f32 %v498, %v518
          %v535 = vadd.f32 %v499, %v519
          %v536 = vadd.f32 %v500, %v520
          %v537 = vadd.f32 %v501, %v521
          %v538 = vadd.f32 %v502, %v522
          %v539 = vadd.f32 %v503, %v523
          %v540 = vadd.f32 %v504, %v524
          %v541 = vadd.f32 %v505, %v525
          %v542 = vadd.f32 %v506, %v526
          %v543 = vadd.f32 %v507, %v527
          %v544 = vadd.f32 %v508, %v528
          %v545 = vadd.f32 %v509, %v529
          %v546 = vadd.f32 %v510, %v530
          %v547 = vlaneseq
          %v548 = vshrl.u32 %v547, 7
          %v549 = vsub.s32 0, %v548
          %v550 = vrot.slane %v329, %v549
          %v551 = vmul.f32 %v459, %v550
          %v552 = vmul.f32 %v460, %v550
          %v553 = vmul.f32 %v461, %v550
          %v554 = vmul.f32 %v462, %v550
          %v555 = vmul.f32 %v463, %v550
          %v556 = vmul.f32 %v464, %v550
          %v557 = vmul.f32 %v465, %v550
          %v558 = vmul.f32 %v466, %v550
          %v559 = vmul.f32 %v467, %v550
          %v560 = vmul.f32 %v468, %v550
          %v561 = vmul.f32 %v469, %v550
          %v562 = vmul.f32 %v470, %v550
          %v563 = vmul.f32 %v471, %v550
          %v564 = vmul.f32 %v472, %v550
          %v565 = vmul.f32 %v473, %v550
          %v566 = vmul.f32 %v474, %v550
          %v567 = vadd.f32 %v531, %v551
          %v568 = vadd.f32 %v532, %v552
          %v569 = vadd.f32 %v533, %v553
          %v570 = vadd.f32 %v534, %v554
          %v571 = vadd.f32 %v535, %v555
          %v572 = vadd.f32 %v536, %v556
          %v573 = vadd.f32 %v537, %v557
          %v574 = vadd.f32 %v538, %v558
          %v575 = vadd.f32 %v539, %v559
          %v576 = vadd.f32 %v540, %v560
          %v577 = vadd.f32 %v541, %v561
          %v578 = vadd.f32 %v542, %v562
          %v579 = vadd.f32 %v543, %v563
          %v580 = vadd.f32 %v544, %v564
          %v581 = vadd.f32 %v545, %v565
          %v582 = vadd.f32 %v546, %v566
          %v583 = vld [vmem:[%s342 + $0x2] sm:$0xff]
          %v584 = vld [vmem:[%s342 + $0xa] sm:$0xff]
          %v585 = vld [vmem:[%s342 + $0x1a] sm:$0xff]
          %v586 = vld [vmem:[%s342 + $0x22] sm:$0xff]
          %v587 = vld [vmem:[%s342 + $0x32] sm:$0xff]
          %v588 = vld [vmem:[%s342 + $0x3a] sm:$0xff]
          %v589 = vld [vmem:[%s342 + $0x4a] sm:$0xff]
          %v590 = vld [vmem:[%s342 + $0x52] sm:$0xff]
          %v591 = vld [vmem:[%s342 + $0x62] sm:$0xff]
          %v592 = vld [vmem:[%s342 + $0x6a] sm:$0xff]
          %v593 = vld [vmem:[%s342 + $0x7a] sm:$0xff]
          %v594 = vld [vmem:[%s342 + $0x82] sm:$0xff]
          %v595 = vld [vmem:[%s342 + $0x92] sm:$0xff]
          %v596 = vld [vmem:[%s342 + $0x9a] sm:$0xff]
          %v597 = vld [vmem:[%s342 + $0xaa] sm:$0xff]
          %v598 = vld [vmem:[%s342 + $0xb2] sm:$0xff]
          %v599 = vld [vmem:[%s342 + $0xc2] sm:$0xff]
          %v600 = vld [vmem:[%s342 + $0xca] sm:$0xff]
          %v601 = vld [vmem:[%s342 + $0xda] sm:$0xff]
          %v602 = vld [vmem:[%s342 + $0xe2] sm:$0xff]
          %v603 = vlaneseq
          %v604 = vshrl.u32 %v603, 7
          %v605 = vsub.s32 0, %v604
          %v606 = vrot.slane %v324, %v605
          %v607 = vmul.f32 %v583, %v606
          %v608 = vmul.f32 %v584, %v606
          %v609 = vmul.f32 %v585, %v606
          %v610 = vmul.f32 %v586, %v606
          %v611 = vmul.f32 %v587, %v606
          %v612 = vmul.f32 %v588, %v606
          %v613 = vmul.f32 %v589, %v606
          %v614 = vmul.f32 %v590, %v606
          %v615 = vmul.f32 %v591, %v606
          %v616 = vmul.f32 %v592, %v606
          %v617 = vmul.f32 %v593, %v606
          %v618 = vmul.f32 %v594, %v606
          %v619 = vmul.f32 %v595, %v606
          %v620 = vmul.f32 %v596, %v606
          %v621 = vmul.f32 %v597, %v606
          %v622 = vmul.f32 %v598, %v606
          %v623 = vadd.f32 %v567, %v607
          %v624 = vadd.f32 %v568, %v608
          %v625 = vadd.f32 %v569, %v609
          %v626 = vadd.f32 %v570, %v610
          %v627 = vadd.f32 %v571, %v611
          %v628 = vadd.f32 %v572, %v612
          %v629 = vadd.f32 %v573, %v613
          %v630 = vadd.f32 %v574, %v614
          %v631 = vadd.f32 %v575, %v615
          %v632 = vadd.f32 %v576, %v616
          %v633 = vadd.f32 %v577, %v617
          %v634 = vadd.f32 %v578, %v618
          %v635 = vadd.f32 %v579, %v619
          %v636 = vadd.f32 %v580, %v620
          %v637 = vadd.f32 %v581, %v621
          %v638 = vadd.f32 %v582, %v622
          %v639 = vlaneseq
          %v640 = vshrl.u32 %v639, 7
          %v641 = vsub.s32 0, %v640
          %v642 = vrot.slane %v327, %v641
          %v643 = vmul.f32 %v585, %v642
          %v644 = vmul.f32 %v586, %v642
          %v645 = vmul.f32 %v587, %v642
          %v646 = vmul.f32 %v588, %v642
          %v647 = vmul.f32 %v589, %v642
          %v648 = vmul.f32 %v590, %v642
          %v649 = vmul.f32 %v591, %v642
          %v650 = vmul.f32 %v592, %v642
          %v651 = vmul.f32 %v593, %v642
          %v652 = vmul.f32 %v594, %v642
          %v653 = vmul.f32 %v595, %v642
          %v654 = vmul.f32 %v596, %v642
          %v655 = vmul.f32 %v597, %v642
          %v656 = vmul.f32 %v598, %v642
          %v657 = vmul.f32 %v599, %v642
          %v658 = vmul.f32 %v600, %v642
          %v659 = vadd.f32 %v623, %v643
          %v660 = vadd.f32 %v624, %v644
          %v661 = vadd.f32 %v625, %v645
          %v662 = vadd.f32 %v626, %v646
          %v663 = vadd.f32 %v627, %v647
          %v664 = vadd.f32 %v628, %v648
          %v665 = vadd.f32 %v629, %v649
          %v666 = vadd.f32 %v630, %v650
          %v667 = vadd.f32 %v631, %v651
          %v668 = vadd.f32 %v632, %v652
          %v669 = vadd.f32 %v633, %v653
          %v670 = vadd.f32 %v634, %v654
          %v671 = vadd.f32 %v635, %v655
          %v672 = vadd.f32 %v636, %v656
          %v673 = vadd.f32 %v637, %v657
          %v674 = vadd.f32 %v638, %v658
          %v675 = vlaneseq
          %v676 = vshrl.u32 %v675, 7
          %v677 = vsub.s32 0, %v676
          %v678 = vrot.slane %v330, %v677
          %v679 = vmul.f32 %v587, %v678
          %v680 = vmul.f32 %v588, %v678
          %v681 = vmul.f32 %v589, %v678
          %v682 = vmul.f32 %v590, %v678
          %v683 = vmul.f32 %v591, %v678
          %v684 = vmul.f32 %v592, %v678
          %v685 = vmul.f32 %v593, %v678
          %v686 = vmul.f32 %v594, %v678
          %v687 = vmul.f32 %v595, %v678
          %v688 = vmul.f32 %v596, %v678
          %v689 = vmul.f32 %v597, %v678
          %v690 = vmul.f32 %v598, %v678
          %v691 = vmul.f32 %v599, %v678
          %v692 = vmul.f32 %v600, %v678
          %v693 = vmul.f32 %v601, %v678
          %v694 = vmul.f32 %v602, %v678
          %v695 = vadd.f32 %v659, %v679
          %v696 = vadd.f32 %v660, %v680
          %v697 = vadd.f32 %v661, %v681
          %v698 = vadd.f32 %v662, %v682
          %v699 = vadd.f32 %v663, %v683
          %v700 = vadd.f32 %v664, %v684
          %v701 = vadd.f32 %v665, %v685
          %v702 = vadd.f32 %v666, %v686
          %v703 = vadd.f32 %v667, %v687
          %v704 = vadd.f32 %v668, %v688
          %v705 = vadd.f32 %v669, %v689
          %v706 = vadd.f32 %v670, %v690
          %v707 = vadd.f32 %v671, %v691
          %v708 = vadd.f32 %v672, %v692
          %v709 = vadd.f32 %v673, %v693
          %v710 = vadd.f32 %v674, %v694
          %v711 = vlaneseq
          %v712 = vshrl.u32 %v711, 7
          %v713 = vsub.s32 0, %v712
          %v714 = vrot.slane %v331, %v713
          %v715 = vadd.f32 %v695, %v714
          %v716 = vadd.f32 %v696, %v714
          %v717 = vadd.f32 %v697, %v714
          %v718 = vadd.f32 %v698, %v714
          %v719 = vadd.f32 %v699, %v714
          %v720 = vadd.f32 %v700, %v714
          %v721 = vadd.f32 %v701, %v714
          %v722 = vadd.f32 %v702, %v714
          %v723 = vadd.f32 %v703, %v714
          %v724 = vadd.f32 %v704, %v714
          %v725 = vadd.f32 %v705, %v714
          %v726 = vadd.f32 %v706, %v714
          %v727 = vadd.f32 %v707, %v714
          %v728 = vadd.f32 %v708, %v714
          %v729 = vadd.f32 %v709, %v714
          %v730 = vadd.f32 %v710, %v714
          %v731 = vmul.f32 %v715, %v715
          %v732 = vmul.f32 %v716, %v716
          %v733 = vmul.f32 %v717, %v717
          %v734 = vmul.f32 %v718, %v718
          %v735 = vmul.f32 %v719, %v719
          %v736 = vmul.f32 %v720, %v720
          %v737 = vmul.f32 %v721, %v721
          %v738 = vmul.f32 %v722, %v722
          %v739 = vmul.f32 %v723, %v723
          %v740 = vmul.f32 %v724, %v724
          %v741 = vmul.f32 %v725, %v725
          %v742 = vmul.f32 %v726, %v726
          %v743 = vmul.f32 %v727, %v727
          %v744 = vmul.f32 %v728, %v728
          %v745 = vmul.f32 %v729, %v729
          %v746 = vmul.f32 %v730, %v730
          %v747 = vmul.f32 %v715, 0.7978846
          %v748 = vmul.f32 %v716, 0.7978846
          %v749 = vmul.f32 %v717, 0.7978846
          %v750 = vmul.f32 %v718, 0.7978846
          %v751 = vmul.f32 %v719, 0.7978846
          %v752 = vmul.f32 %v720, 0.7978846
          %v753 = vmul.f32 %v721, 0.7978846
          %v754 = vmul.f32 %v722, 0.7978846
          %v755 = vmul.f32 %v723, 0.7978846
          %v756 = vmul.f32 %v724, 0.7978846
          %v757 = vmul.f32 %v725, 0.7978846
          %v758 = vmul.f32 %v726, 0.7978846
          %v759 = vmul.f32 %v727, 0.7978846
          %v760 = vmul.f32 %v728, 0.7978846
          %v761 = vmul.f32 %v729, 0.7978846
          %v762 = vmul.f32 %v730, 0.7978846
          %v763 = vmul.f32 %v731, 0.044715
          %v764 = vmul.f32 %v732, 0.044715
          %v765 = vmul.f32 %v733, 0.044715
          %v766 = vmul.f32 %v734, 0.044715
          %v767 = vmul.f32 %v735, 0.044715
          %v768 = vmul.f32 %v736, 0.044715
          %v769 = vmul.f32 %v737, 0.044715
          %v770 = vmul.f32 %v738, 0.044715
          %v771 = vmul.f32 %v739, 0.044715
          %v772 = vmul.f32 %v740, 0.044715
          %v773 = vmul.f32 %v741, 0.044715
          %v774 = vmul.f32 %v742, 0.044715
          %v775 = vmul.f32 %v743, 0.044715
          %v776 = vmul.f32 %v744, 0.044715
          %v777 = vmul.f32 %v745, 0.044715
          %v778 = vmul.f32 %v746, 0.044715
          %v779 = vadd.f32 %v763, 1.0
          %v780 = vadd.f32 %v764, 1.0
          %v781 = vadd.f32 %v765, 1.0
          %v782 = vadd.f32 %v766, 1.0
          %v783 = vadd.f32 %v767, 1.0
          %v784 = vadd.f32 %v768, 1.0
          %v785 = vadd.f32 %v769, 1.0
          %v786 = vadd.f32 %v770, 1.0
          %v787 = vadd.f32 %v771, 1.0
          %v788 = vadd.f32 %v772, 1.0
          %v789 = vadd.f32 %v773, 1.0
          %v790 = vadd.f32 %v774, 1.0
          %v791 = vadd.f32 %v775, 1.0
          %v792 = vadd.f32 %v776, 1.0
          %v793 = vadd.f32 %v777, 1.0
          %v794 = vadd.f32 %v778, 1.0
          %v795 = vmul.f32 %v747, %v779
          %v796 = vmul.f32 %v748, %v780
          %v797 = vmul.f32 %v749, %v781
          %v798 = vmul.f32 %v750, %v782
          %v799 = vmul.f32 %v751, %v783
          %v800 = vmul.f32 %v752, %v784
          %v801 = vmul.f32 %v753, %v785
          %v802 = vmul.f32 %v754, %v786
          %v803 = vmul.f32 %v755, %v787
          %v804 = vmul.f32 %v756, %v788
          %v805 = vmul.f32 %v757, %v789
          %v806 = vmul.f32 %v758, %v790
          %v807 = vmul.f32 %v759, %v791
          %v808 = vmul.f32 %v760, %v792
          %v809 = vmul.f32 %v761, %v793
          %v810 = vmul.f32 %v762, %v794
          %v811 = vmul.f32 %v715, 0.5
          %v812 = vmul.f32 %v716, 0.5
          %v813 = vmul.f32 %v717, 0.5
          %v814 = vmul.f32 %v718, 0.5
          %v815 = vmul.f32 %v719, 0.5
          %v816 = vmul.f32 %v720, 0.5
          %v817 = vmul.f32 %v721, 0.5
          %v818 = vmul.f32 %v722, 0.5
          %v819 = vmul.f32 %v723, 0.5
          %v820 = vmul.f32 %v724, 0.5
          %v821 = vmul.f32 %v725, 0.5
          %v822 = vmul.f32 %v726, 0.5
          %v823 = vmul.f32 %v727, 0.5
          %v824 = vmul.f32 %v728, 0.5
          %v825 = vmul.f32 %v729, 0.5
          %v826 = vmul.f32 %v730, 0.5
          %v827 = vtanh.pop %v795
          %v828 = vtanh.pop %v796
          %v829 = vtanh.pop %v797
          %v830 = vtanh.pop %v798
          %v831 = vtanh.pop %v799
          %v832 = vtanh.pop %v800
          %v833 = vtanh.pop %v801
          %v834 = vtanh.pop %v802
          %v835 = vtanh.pop %v803
          %v836 = vtanh.pop %v804
          %v837 = vtanh.pop %v805
          %v838 = vtanh.pop %v806
          %v839 = vtanh.pop %v807
          %v840 = vtanh.pop %v808
          %v841 = vtanh.pop %v809
          %v842 = vtanh.pop %v810
          %v843 = vadd.f32 %v827, 1.0
          %v844 = vadd.f32 %v828, 1.0
          %v845 = vadd.f32 %v829, 1.0
          %v846 = vadd.f32 %v830, 1.0
          %v847 = vadd.f32 %v831, 1.0
          %v848 = vadd.f32 %v832, 1.0
          %v849 = vadd.f32 %v833, 1.0
          %v850 = vadd.f32 %v834, 1.0
          %v851 = vadd.f32 %v835, 1.0
          %v852 = vadd.f32 %v836, 1.0
          %v853 = vadd.f32 %v837, 1.0
          %v854 = vadd.f32 %v838, 1.0
          %v855 = vadd.f32 %v839, 1.0
          %v856 = vadd.f32 %v840, 1.0
          %v857 = vadd.f32 %v841, 1.0
          %v858 = vadd.f32 %v842, 1.0
          %v859 = vmul.f32 %v811, %v843
          %v860 = vmul.f32 %v812, %v844
          %v861 = vmul.f32 %v813, %v845
          %v862 = vmul.f32 %v814, %v846
          %v863 = vmul.f32 %v815, %v847
          %v864 = vmul.f32 %v816, %v848
          %v865 = vmul.f32 %v817, %v849
          %v866 = vmul.f32 %v818, %v850
          %v867 = vmul.f32 %v819, %v851
          %v868 = vmul.f32 %v820, %v852
          %v869 = vmul.f32 %v821, %v853
          %v870 = vmul.f32 %v822, %v854
          %v871 = vmul.f32 %v823, %v855
          %v872 = vmul.f32 %v824, %v856
          %v873 = vmul.f32 %v825, %v857
          %v874 = vmul.f32 %v826, %v858
          %v875 = vlaneseq
          %v876 = vshrl.u32 %v875, 7
          %v877 = vsub.s32 0, %v876
          %v878 = vrot.slane %v332, %v877
          %v879 = vmul.f32 %v859, %v878
          %v880 = vmul.f32 %v860, %v878
          %v881 = vmul.f32 %v861, %v878
          %v882 = vmul.f32 %v862, %v878
          %v883 = vmul.f32 %v863, %v878
          %v884 = vmul.f32 %v864, %v878
          %v885 = vmul.f32 %v865, %v878
          %v886 = vmul.f32 %v866, %v878
          %v887 = vmul.f32 %v867, %v878
          %v888 = vmul.f32 %v868, %v878
          %v889 = vmul.f32 %v869, %v878
          %v890 = vmul.f32 %v870, %v878
          %v891 = vmul.f32 %v871, %v878
          %v892 = vmul.f32 %v872, %v878
          %v893 = vmul.f32 %v873, %v878
          %v894 = vmul.f32 %v874, %v878
          %v895 = vlaneseq
          %v896 = vshrl.u32 %v895, 7
          %v897 = vsub.s32 0, %v896
          %v898 = vrot.slane %v333, %v897
          %v899 = vadd.f32 %v879, %v898
          %v900 = vadd.f32 %v880, %v898
          %v901 = vadd.f32 %v881, %v898
          %v902 = vadd.f32 %v882, %v898
          %v903 = vadd.f32 %v883, %v898
          %v904 = vadd.f32 %v884, %v898
          %v905 = vadd.f32 %v885, %v898
          %v906 = vadd.f32 %v886, %v898
          %v907 = vadd.f32 %v887, %v898
          %v908 = vadd.f32 %v888, %v898
          %v909 = vadd.f32 %v889, %v898
          %v910 = vadd.f32 %v890, %v898
          %v911 = vadd.f32 %v891, %v898
          %v912 = vadd.f32 %v892, %v898
          %v913 = vadd.f32 %v893, %v898
          %v914 = vadd.f32 %v894, %v898
          %s915 = smul.u32 %s340, 16
          %s916 = scalar_lea.vmem %s183, %s915 [#allocation3]
          %v917 = vld [vmem:[%s916] sm:$0xff]
          %v918 = vld [vmem:[%s916 + $0x8] sm:$0xff]
          %v919 = vld [vmem:[%s916 + $0x10] sm:$0xff]
          %v920 = vld [vmem:[%s916 + $0x18] sm:$0xff]
          %v921 = vld [vmem:[%s916 + $0x20] sm:$0xff]
          %v922 = vld [vmem:[%s916 + $0x28] sm:$0xff]
          %v923 = vld [vmem:[%s916 + $0x30] sm:$0xff]
          %v924 = vld [vmem:[%s916 + $0x38] sm:$0xff]
          %v925 = vld [vmem:[%s916 + $0x40] sm:$0xff]
          %v926 = vld [vmem:[%s916 + $0x48] sm:$0xff]
          %v927 = vld [vmem:[%s916 + $0x50] sm:$0xff]
          %v928 = vld [vmem:[%s916 + $0x58] sm:$0xff]
          %v929 = vld [vmem:[%s916 + $0x60] sm:$0xff]
          %v930 = vld [vmem:[%s916 + $0x68] sm:$0xff]
          %v931 = vld [vmem:[%s916 + $0x70] sm:$0xff]
          %v932 = vld [vmem:[%s916 + $0x78] sm:$0xff]
          %v933 = vadd.f32 %v899, %v917
          %v934 = vadd.f32 %v900, %v918
          %v935 = vadd.f32 %v901, %v919
          %v936 = vadd.f32 %v902, %v920
          %v937 = vadd.f32 %v903, %v921
          %v938 = vadd.f32 %v904, %v922
          %v939 = vadd.f32 %v905, %v923
          %v940 = vadd.f32 %v906, %v924
          %v941 = vadd.f32 %v907, %v925
          %v942 = vadd.f32 %v908, %v926
          %v943 = vadd.f32 %v909, %v927
          %v944 = vadd.f32 %v910, %v928
          %v945 = vadd.f32 %v911, %v929
          %v946 = vadd.f32 %v912, %v930
          %v947 = vadd.f32 %v913, %v931
          %v948 = vadd.f32 %v914, %v932
          %s949 = scalar_lea.vmem %s217, %s915 [#allocation8]
          %950 = vst [vmem:[%s949] sm:$0xff] %v933
          %951 = vst [vmem:[%s949 + $0x8] sm:$0xff] %v934
          %952 = vst [vmem:[%s949 + $0x10] sm:$0xff] %v935
          %953 = vst [vmem:[%s949 + $0x18] sm:$0xff] %v936
          %954 = vst [vmem:[%s949 + $0x20] sm:$0xff] %v937
          %955 = vst [vmem:[%s949 + $0x28] sm:$0xff] %v938
          %956 = vst [vmem:[%s949 + $0x30] sm:$0xff] %v939
          %957 = vst [vmem:[%s949 + $0x38] sm:$0xff] %v940
          %958 = vst [vmem:[%s949 + $0x40] sm:$0xff] %v941
          %959 = vst [vmem:[%s949 + $0x48] sm:$0xff] %v942
          %960 = vst [vmem:[%s949 + $0x50] sm:$0xff] %v943
          %961 = vst [vmem:[%s949 + $0x58] sm:$0xff] %v944
          %962 = vst [vmem:[%s949 + $0x60] sm:$0xff] %v945
          %963 = vst [vmem:[%s949 + $0x68] sm:$0xff] %v946
          %964 = vst [vmem:[%s949 + $0x70] sm:$0xff] %v947
          %965 = vst [vmem:[%s949 + $0x78] sm:$0xff] %v948
        $region41: #{tpu_custom_call.1} parent=27 // loop_footer
          %s339 = sadd.s32 1, %s335
        $region42: #{tpu_custom_call.1} parent=27 // loop_footer_branch
          %334 = sbr.rel target = $region38
        $region43: #{tpu_custom_call.1} parent=27 // loop_exit
          _
        %s966 = sand.u32 %s98, 1
        %s967 = scalar_lea.sflag [#allocation5], %s966
        %s968 = sand.u32 %s98, 1
        %s969 = smul.addr %s968, 256
        %s970 = scalar_lea.vmem [#allocation8], %s969
        // Predicated region
        $region44: #{tpu_custom_call.1} parent=27 // pred_check
          %p971 = pneg %p108
        $region45: #{tpu_custom_call.1} parent=27 // pred_check_branch
          %973 = sbr.rel (%p971) target = $region47
        $region46: #{tpu_custom_call.1} parent=27 // pred_region
          %s975 = ssub.s32 4096, 4096
          %976 = vsyncadd %s967, %s975
          %s977 = smul.addr %s26, 64
          %s978 = sadd.s32 %s27, %s977
          %s979 = smul.addr %s978, 128
          %s980 = scalar_lea.hbm %s2, %s979
          %s981 = sshll.u32 %s970, 4
          %s982 = int_to_ptr.vmem [resolvable:$true] %s981
          %987 = dma.vmem_to_hbm [thread:$0]  %s982, 4096, %s980, %s967, 128, 256, 8
        $region47: #{tpu_custom_call.1} parent=27 // pred_fallthru
          _
      $region28: #{tpu_custom_call.1} parent=5 // pred_fallthru
        _
      %p988 = scmp.le.s32.totalorder 2, %s17
      // Predicated region
      $region48: #{tpu_custom_call.1} parent=5 // pred_check
        %p989 = pneg %p988
      $region49: #{tpu_custom_call.1} parent=5 // pred_check_branch
        %991 = sbr.rel (%p989) target = $region51
      $region50: #{tpu_custom_call.1} parent=5 // pred_region
        %s992 = ssub.s32 %s17, 2
        // Predicated region
        $region52: #{tpu_custom_call.1} parent=50 // pred_check
          %p993 = pneg %p114
        $region53: #{tpu_custom_call.1} parent=50 // pred_check_branch
          %995 = sbr.rel (%p993) target = $region55
        $region54: #{tpu_custom_call.1} parent=50 // pred_region
          %s996 = sand.u32 %s99, 1
          %s997 = scalar_lea.sflag [#allocation5], %s996
          %s998 = sand.u32 %s99, 1
          %s999 = smul.addr %s998, 256
          %s1000 = scalar_lea.vmem [#allocation8], %s999
          %1001 = dma.done %s997, 4096
        $region55: #{tpu_custom_call.1} parent=50 // pred_fallthru
          _
      $region51: #{tpu_custom_call.1} parent=5 // pred_fallthru
        _
    $region6: #{tpu_custom_call.1} parent=1 // loop_footer
      %s21 = sadd.s32 1, %s17
    $region7: #{tpu_custom_call.1} parent=1 // loop_footer_branch
      %16 = sbr.rel target = $region3
    $region8: #{tpu_custom_call.1} parent=1 // loop_exit
      _
    %1002 = vsyncpa [#allocation4], 1
    %s1003 = scalar_lea.sflag [#allocation4], 1
    %1004 = vsyncpa %s1003, 1
    %1005 = vsyncpa [#allocation7], 1
    %s1006 = scalar_lea.sflag [#allocation7], 1
    %1007 = vsyncpa %s1006, 1
    %1008 = vsyncpa [#allocation5], 1
    %s1009 = scalar_lea.sflag [#allocation5], 1
    %1010 = vsyncpa %s1009, 1

</llo_original>
